<compile_context>
chip_gen: v7x
topology: tpu7x:2x2x1
jax: 0.10.0
libtpu: 0.0.40
codegen_flags: <defaults>
</compile_context>

<pallas_src>
import math

import jax
import jax.numpy as jnp
from jax import lax
from jax.experimental import pallas as pl
from jax.experimental.pallas import tpu as pltpu

B = 8                          # demo batch
HIDDEN = 32                    # hidden_size == input_size (forced by `input * pos_embed`)
HEADS = 4                      # num_attention_heads
HEAD_DIM = HIDDEN // HEADS     # 8  -> attention "sequence" length
PAIRS = HEAD_DIM * HEAD_DIM    # 64 -> all (d, e) score pairs, kept in lanes
EXPAND = HEADS * PAIRS         # 256 -> per-head expanded width
EPS = 1e-12
LAMBDA_GUIDE = 5.0

W1_ROWS = 40                   # 32 weight rows + 4 bias rows, padded to sublane mult.
W1_COLS = 3 * EXPAND + HIDDEN  # 800 = [wq_exp | wk_exp | wv_exp | dense(pos-folded)]
W2_ROWS = EXPAND + PAIRS       # 320 = rows 0:256 (contraction 256), 256:320 (contraction 64)
W2_COLS = 160                  # lanes 0:64 first matrix, 128:160 second (128-aligned)


def self_attention_kernel(xt_ref, w1_ref, w2_ref, out_ref):
    f32 = jnp.float32
    D = HIDDEN

    x = xt_ref[0]                                     # (TB, D) original input
    t = xt_ref[1]                                     # (TB, D) target

    # ---- packed constants (static, tile-aligned slices) --------------------
    w_q = w1_ref[0:D, 0:EXPAND]                       # q proj (pos & 1/sqrt(dh) folded)
    w_kv = w1_ref[0:D, EXPAND:3 * EXPAND]             # fused k|v proj
    w_d = w1_ref[0:D, 3 * EXPAND:3 * EXPAND + D]      # dense, 2nd application (pos folded)
    b_q = w1_ref[D:D + 1, 0:EXPAND]                   # (1, 256)
    b_kv = w1_ref[D + 1:D + 2, 0:2 * EXPAND]          # (1, 512)
    b_d = w1_ref[D + 2:D + 3, 0:D]                    # (1, 32)
    b_out = w1_ref[D + 3:D + 4, 0:D]                  # (1, 32)  bo + ln_b @ (L*blur@wo)

    f_sum = w2_ref[0:EXPAND, 0:PAIRS]                 # (256, 64) head-sum fold (0/1)
    r_wd = w2_ref[0:EXPAND, 128:128 + D]              # (256, 32) context-reduce @ dense
    a_grp = w2_ref[EXPAND:EXPAND + PAIRS, 0:PAIRS]    # (64, 64)  softmax group-sum (0/1)
    w_tl = w2_ref[EXPAND:EXPAND + PAIRS, 128:128 + D] # (64, 32)  [wo ; ln_w*(L*blur@wo)]

    # ---- q / k|v projections fused with the per-head broadcast -------------
    q_exp = jnp.dot(x, w_q, preferred_element_type=f32) + b_q     # (TB, 256)
    kv = jnp.dot(t, w_kv, preferred_element_type=f32) + b_kv      # (TB, 512)
    k_exp = kv[:, 0:EXPAND]
    v_exp = kv[:, EXPAND:2 * EXPAND]

    # ---- attention scores: head sum via one lane-aligned MXU matmul --------
    scores = jnp.dot(q_exp * k_exp, f_sum, preferred_element_type=f32)  # (TB, 64)

    # Softmax over e within every d-group of 8 lanes.  The row max is constant
    # within a group, so subtracting it is exact; the denom clamp guards the
    # approx reciprocal against a fully-underflowed non-dominant group.
    scores = scores - jnp.max(scores, axis=-1, keepdims=True)
    ex = jnp.exp(scores)
    denom = jnp.dot(ex, a_grp, preferred_element_type=f32)              # (TB, 64)
    probs = ex * pl.reciprocal(jnp.maximum(denom, 1e-30), approx=True)
    # TODO(synk): attn_dropout / out_dropout are identity (eval mode).

    # ---- context + dense (R @ dense pre-folded into r_wd) ------------------
    pv = jnp.concatenate([probs] * HEADS, axis=1) * v_exp               # (TB, 256)
    hid = jnp.dot(pv, r_wd, preferred_element_type=f32) + b_d           # (TB, 32)
    hid = hid * x                                     # * (input*pos_embed): pos folded into w_d
    hid = jnp.dot(hid, w_d, preferred_element_type=f32) + b_d           # (TB, 32)

    # ---- TF-style LayerNorm; affine folded into w_tl / b_out ---------------
    u = jnp.mean(hid, axis=-1, keepdims=True)
    m2 = jnp.mean(hid * hid, axis=-1, keepdims=True)
    var = jnp.maximum(m2 - u * u, 0.0)
    hnorm = (hid - u) * lax.rsqrt(var + EPS)

    # ---- folded tail: LayerNorm affine + blur + lambda-guide + out Linear --
    u_tail = t + (1.0 - LAMBDA_GUIDE) * x
    tail = jnp.concatenate([u_tail, hnorm], axis=1)                      # (TB, 64)
    out_ref[...] = jnp.dot(tail, w_tl, preferred_element_type=f32) + b_out


def gaussian_blur_matrix(dim):
    """(dim, dim) matrix G s.t. x @ G == F.conv1d(x, gauss_kernel, padding=2)."""
    ksize, sigma = 5, 0.5
    xs = jnp.arange(-(ksize // 2), ksize // 2 + 1, dtype=jnp.float32)
    kern = jnp.exp(-0.5 * (xs / sigma) ** 2)
    kern = kern / jnp.sum(kern)
    j = jnp.arange(dim)[:, None]
    i = jnp.arange(dim)[None, :]
    off = j - i + ksize // 2
    valid = (off >= 0) & (off < ksize)
    return jnp.where(valid, kern[jnp.clip(off, 0, ksize - 1)], 0.0).astype(jnp.float32)


def init_params(key):
    """Raw torch-style parameters (weights pre-transposed to (D_in, D_out))."""
    ks = jax.random.split(key, 5)

    def linear(k, din, dout):
        kw, kb = jax.random.split(k)
        bound = 1.0 / math.sqrt(din)
        w = jax.random.uniform(kw, (din, dout), jnp.float32, -bound, bound)
        b = jax.random.uniform(kb, (1, dout), jnp.float32, -bound, bound)
        return w, b

    wq, bq = linear(ks[0], HIDDEN, HIDDEN)
    wk, bk = linear(ks[1], HIDDEN, HIDDEN)
    wv, bv = linear(ks[2], HIDDEN, HIDDEN)
    wd, bd = linear(ks[3], HIDDEN, HIDDEN)
    wo, bo = linear(ks[4], HIDDEN, HIDDEN)
    pos = jnp.sin(1.0 / (10000.0 ** (jnp.arange(HIDDEN, dtype=jnp.float32)
                                     / (HIDDEN - 1)))).reshape(1, HIDDEN)
    return dict(pos_embed=pos,
                wq=wq, bq=bq, wk=wk, bk=bk, wv=wv, bv=bv,
                wd=wd, bd=bd,
                ln_w=jnp.ones((1, HIDDEN), jnp.float32),
                ln_b=jnp.zeros((1, HIDDEN), jnp.float32),
                blur=gaussian_blur_matrix(HIDDEN),
                wo=wo, bo=bo)


def pack_params(p):
    """Fold / pack the raw parameters into two constant slabs for the kernel."""
    f32 = jnp.float32
    D, H, Dh = HIDDEN, HEADS, HEAD_DIM

    col_d = jnp.repeat(jnp.arange(Dh), Dh)                               # (64,)
    col_e = jnp.tile(jnp.arange(Dh), Dh)                                 # (64,)
    E_d = (jnp.arange(Dh)[:, None] == col_d[None, :]).astype(f32)        # (8, 64)
    E_e = (jnp.arange(Dh)[:, None] == col_e[None, :]).astype(f32)        # (8, 64)

    def expand(w, b, E):
        # expanded[:, h*64 + c] = w[:, h*8 + index(c)]  (per-head broadcast)
        w3 = w.reshape(D, H, Dh)
        wexp = jnp.einsum("ihd,dc->ihc", w3, E).reshape(D, EXPAND)
        bexp = (b.reshape(H, Dh) @ E).reshape(1, EXPAND)
        return wexp, bexp

    pos_col = p["pos_embed"].reshape(D, 1)
    scale = 1.0 / math.sqrt(Dh)
    # pos_embed and 1/sqrt(head_dim) folded into the query projection.
    wq_exp, bq_exp = expand(scale * pos_col * p["wq"], scale * p["bq"], E_d)
    wk_exp, bk_exp = expand(p["wk"], p["bk"], E_e)
    wv_exp, bv_exp = expand(p["wv"], p["bv"], E_e)

    # Head-sum fold: scores[:, c] = sum_h qk[:, h*64 + c]   (0/1, exact).
    F = jnp.tile(jnp.eye(PAIRS, dtype=f32), (H, 1))                      # (256, 64)
    # Softmax group-sum over e within each d-group of 8 lanes (0/1, exact).
    A = (col_d[:, None] == col_d[None, :]).astype(f32)                   # (64, 64)
    # Context reduction R[h*64+d*8+e, h*8+d] = 1, pre-folded with dense.
    colh = jnp.repeat(jnp.arange(H), PAIRS)                              # (256,)
    cold = jnp.tile(col_d, H)                                            # (256,)
    outh = jnp.repeat(jnp.arange(H), Dh)                                 # (32,)
    outd = jnp.tile(jnp.arange(Dh), H)                                   # (32,)
    R = ((colh[:, None] == outh[None, :])
         & (cold[:, None] == outd[None, :])).astype(f32)                 # (256, 32)
    r_wd = R @ p["wd"]                                                   # (256, 32)

    # Second dense application sees (hid * input * pos): fold pos into dense.
    w_d_pos = pos_col * p["wd"]                                          # (32, 32)

    # Tail fold: out = u_tail@wo + hnorm@(ln_w*(L*blur@wo)) + (bo + ln_b@(L*blur@wo))
    w_br = LAMBDA_GUIDE * (p["blur"] @ p["wo"])                          # (32, 32)
    w_bo = p["ln_w"].reshape(D, 1) * w_br
    b_out = p["bo"] + p["ln_b"] @ w_br                                   # (1, 32)
    w_tail = jnp.concatenate([p["wo"], w_bo], axis=0)                    # (64, 32)

    # ---- slab 1: contraction-D weights + bias rows, (40, 800) --------------
    w1 = jnp.zeros((W1_ROWS, W1_COLS), f32)
    w1 = w1.at[0:D, 0:EXPAND].set(wq_exp)
    w1 = w1.at[0:D, EXPAND:2 * EXPAND].set(wk_exp)
    w1 = w1.at[0:D, 2 * EXPAND:3 * EXPAND].set(wv_exp)
    w1 = w1.at[0:D, 3 * EXPAND:3 * EXPAND + D].set(w_d_pos)
    w1 = w1.at[D + 0, 0:EXPAND].set(bq_exp[0])
    w1 = w1.at[D + 1, 0:EXPAND].set(bk_exp[0])
    w1 = w1.at[D + 1, EXPAND:2 * EXPAND].set(bv_exp[0])
    w1 = w1.at[D + 2, 0:D].set(p["bd"][0])
    w1 = w1.at[D + 3, 0:D].set(b_out[0])

    # ---- slab 2: score / context / tail matrices, (320, 160) ---------------
    w2 = jnp.zeros((W2_ROWS, W2_COLS), f32)
    w2 = w2.at[0:EXPAND, 0:PAIRS].set(F)
    w2 = w2.at[0:EXPAND, 128:128 + D].set(r_wd)
    w2 = w2.at[EXPAND:, 0:PAIRS].set(A)
    w2 = w2.at[EXPAND:, 128:128 + D].set(w_tail)
    # TODO(synk): cast w1/w2 to bfloat16 for v6e/v7x DMA savings; kept f32 here so
    # the correctness gate stays tight and v5e avoids bf16<->f32 VPU conversions.
    return dict(w1=w1, w2=w2)


def self_attention_pallas(x, target, packed, *, batch_tile=256):
    bsz, d = x.shape
    assert d == HIDDEN
    # Batch tile: multiple of 8 sublanes, capped so big batches stream through a
    # "parallel" grid (fills MXU rows; uses both TensorCores on v7x).
    tb = min(batch_tile, ((bsz + 7) // 8) * 8)
    bp = ((bsz + tb - 1) // tb) * tb
    xt = jnp.stack([x, target])                       # (2, B, D): one input DMA
    if bp != bsz:
        xt = jnp.pad(xt, ((0, 0), (0, bp - bsz), (0, 0)))
    w1, w2 = packed["w1"], packed["w2"]

    flops = 2 * bp * (HIDDEN * EXPAND + HIDDEN * 2 * EXPAND + EXPAND * PAIRS
                      + PAIRS * PAIRS + EXPAND * HIDDEN + HIDDEN * HIDDEN
                      + 2 * HIDDEN * HIDDEN)
    cost = pl.CostEstimate(
        flops=int(flops),
        transcendentals=int(bp * (2 * PAIRS + 1)),
        bytes_accessed=int(4 * (xt.size + w1.size + w2.size + bp * HIDDEN)))

    out = pl.pallas_call(
        self_attention_kernel,
        out_shape=jax.ShapeDtypeStruct((bp, HIDDEN), jnp.float32),
        grid=(bp // tb,),
        in_specs=[
            pl.BlockSpec((2, tb, HIDDEN), lambda i: (0, i, 0)),
            pl.BlockSpec(w1.shape, lambda i: (0, 0)),   # constants: same block each step
            pl.BlockSpec(w2.shape, lambda i: (0, 0)),
        ],
        out_specs=pl.BlockSpec((tb, HIDDEN), lambda i: (i, 0)),
        compiler_params=pltpu.CompilerParams(dimension_semantics=("parallel",)),
        cost_estimate=cost,
    )(xt, w1, w2)
    return out[:bsz]


def self_attention_reference(x, target, p):
    """Pure-JAX reference mirroring the torch forward (eval mode)."""
    bsz = x.shape[0]
    identity = x
    xp = x * p["pos_embed"]
    q = xp @ p["wq"] + p["bq"]
    k = target @ p["wk"] + p["bk"]
    v = target @ p["wv"] + p["bv"]

    def tfs(z):   # (B, D) -> (B, HEAD_DIM, HEADS)
        return jnp.transpose(z.reshape(bsz, HEADS, HEAD_DIM), (0, 2, 1))

    ql, kl, vl = tfs(q), tfs(k), tfs(v)
    scores = jnp.einsum("bdh,beh->bde", ql, kl) / math.sqrt(HEAD_DIM)
    probs = jax.nn.softmax(scores, axis=-1)
    ctx = jnp.einsum("bde,beh->bdh", probs, vl)
    ctx = jnp.transpose(ctx, (0, 2, 1)).reshape(bsz, HIDDEN)
    hid = ctx @ p["wd"] + p["bd"]
    hid = hid * xp
    hid = hid @ p["wd"] + p["bd"]
    u = hid.mean(-1, keepdims=True)
    s = ((hid - u) ** 2).mean(-1, keepdims=True)
    hid = (hid - u) / jnp.sqrt(s + EPS)
    hid = p["ln_w"] * hid + p["ln_b"]
    blurred = hid @ p["blur"]
    smoothed = identity + LAMBDA_GUIDE * (blurred - identity)
    return (smoothed + target) @ p["wo"] + p["bo"]


if __name__ == "__main__":
    key = jax.random.PRNGKey(0)
    k_x, k_t, k_p = jax.random.split(key, 3)
    params = init_params(k_p)
    packed = pack_params(params)

    # Primary check: B=8 (single batch tile, grid=(1,)).
    x = jax.random.normal(k_x, (B, HIDDEN), jnp.float32)       # input_tensor
    target = jax.random.normal(k_t, (B, HIDDEN), jnp.float32)  # target
    out = jax.block_until_ready(self_attention_pallas(x, target, packed))
    ref = jax.block_until_ready(self_attention_reference(x, target, params))
    assert out.shape == (B, HIDDEN)
    max_err = float(jnp.max(jnp.abs(out - ref)))
    # Tolerance covers the EUP approx reciprocal, rsqrt LayerNorm and the host
    # algebraic folding (reassociated f32 sums); a structural bug is O(1) error.
    if not max_err < 2e-2:
        raise AssertionError(f"kernel/reference mismatch (B=8): max_err={max_err}")

    # Secondary check: the batch-tiled "parallel" grid path (B=20, tile=8 ->
    # grid=(3,) with row padding), i.e. the lever that amortizes fixed overhead
    # and lets v7x use both TensorCores for large batches.
    k_x2, k_t2 = jax.random.split(jax.random.PRNGKey(1))
    x2 = jax.random.normal(k_x2, (20, HIDDEN), jnp.float32)
    t2 = jax.random.normal(k_t2, (20, HIDDEN), jnp.float32)
    out2 = jax.block_until_ready(
        self_attention_pallas(x2, t2, packed, batch_tile=8))
    ref2 = jax.block_until_ready(self_attention_reference(x2, t2, params))
    max_err2 = float(jnp.max(jnp.abs(out2 - ref2)))
    if not max_err2 < 2e-2:
        raise AssertionError(f"kernel/reference mismatch (grid): max_err={max_err2}")

    print("KERNEL_OK")
</pallas_src>

<mosaic_0001>
module attributes {stable_mosaic.version = 11 : i64} {
  func.func @self_attention_kernel(%arg0: i32, %arg1: memref<2x8x32xf32, #tpu.memory_space<vmem>>, %arg2: memref<40x800xf32, #tpu.memory_space<vmem>>, %arg3: memref<320x160xf32, #tpu.memory_space<vmem>>, %arg4: memref<8x32xf32, #tpu.memory_space<vmem>>) attributes {dimension_semantics = [#tpu.dimension_semantics<parallel>], iteration_bounds = array<i64: 1>, scalar_prefetch = 0 : i64, scratch_operands = 0 : i64, tpu.core_type = #tpu.core_type<tc>, window_params = [{transform_indices = @transform_0, window_bounds = array<i64: 2, 8, 32>}, {pipeline_mode = #tpu.pipeline_mode<synchronous>, transform_indices = @transform_1, window_bounds = array<i64: 40, 800>}, {pipeline_mode = #tpu.pipeline_mode<synchronous>, transform_indices = @transform_2, window_bounds = array<i64: 320, 160>}, {transform_indices = @transform_3, window_bounds = array<i64: 8, 32>}]} {
    %c0 = arith.constant 0 : index
    %c0_0 = arith.constant 0 : index
    %c0_1 = arith.constant 0 : index
    %0 = vector.load %arg1[%c0, %c0_0, %c0_1] : memref<2x8x32xf32, #tpu.memory_space<vmem>>, vector<1x8x32xf32>
    %1 = vector.shape_cast %0 : vector<1x8x32xf32> to vector<8x32xf32>
    %c1 = arith.constant 1 : index
    %c0_2 = arith.constant 0 : index
    %c0_3 = arith.constant 0 : index
    %2 = vector.load %arg1[%c1, %c0_2, %c0_3] : memref<2x8x32xf32, #tpu.memory_space<vmem>>, vector<1x8x32xf32>
    %3 = vector.shape_cast %2 : vector<1x8x32xf32> to vector<8x32xf32>
    %c0_4 = arith.constant 0 : index
    %c0_5 = arith.constant 0 : index
    %4 = vector.load %arg2[%c0_4, %c0_5] : memref<40x800xf32, #tpu.memory_space<vmem>>, vector<32x256xf32>
    %c0_6 = arith.constant 0 : index
    %c256 = arith.constant 256 : index
    %5 = vector.load %arg2[%c0_6, %c256] : memref<40x800xf32, #tpu.memory_space<vmem>>, vector<32x512xf32>
    %c0_7 = arith.constant 0 : index
    %c768 = arith.constant 768 : index
    %6 = vector.load %arg2[%c0_7, %c768] : memref<40x800xf32, #tpu.memory_space<vmem>>, vector<32x32xf32>
    %c32 = arith.constant 32 : index
    %c0_8 = arith.constant 0 : index
    %7 = vector.load %arg2[%c32, %c0_8] : memref<40x800xf32, #tpu.memory_space<vmem>>, vector<1x256xf32>
    %c33 = arith.constant 33 : index
    %c0_9 = arith.constant 0 : index
    %8 = vector.load %arg2[%c33, %c0_9] : memref<40x800xf32, #tpu.memory_space<vmem>>, vector<1x512xf32>
    %c34 = arith.constant 34 : index
    %c0_10 = arith.constant 0 : index
    %9 = vector.load %arg2[%c34, %c0_10] : memref<40x800xf32, #tpu.memory_space<vmem>>, vector<1x32xf32>
    %c35 = arith.constant 35 : index
    %c0_11 = arith.constant 0 : index
    %10 = vector.load %arg2[%c35, %c0_11] : memref<40x800xf32, #tpu.memory_space<vmem>>, vector<1x32xf32>
    %c0_12 = arith.constant 0 : index
    %c0_13 = arith.constant 0 : index
    %11 = vector.load %arg3[%c0_12, %c0_13] : memref<320x160xf32, #tpu.memory_space<vmem>>, vector<256x64xf32>
    %c0_14 = arith.constant 0 : index
    %c128 = arith.constant 128 : index
    %12 = vector.load %arg3[%c0_14, %c128] : memref<320x160xf32, #tpu.memory_space<vmem>>, vector<256x32xf32>
    %c256_15 = arith.constant 256 : index
    %c0_16 = arith.constant 0 : index
    %13 = vector.load %arg3[%c256_15, %c0_16] : memref<320x160xf32, #tpu.memory_space<vmem>>, vector<64x64xf32>
    %c256_17 = arith.constant 256 : index
    %c128_18 = arith.constant 128 : index
    %14 = vector.load %arg3[%c256_17, %c128_18] : memref<320x160xf32, #tpu.memory_space<vmem>>, vector<64x32xf32>
    %cst = arith.constant dense<0.000000e+00> : vector<8x256xf32>
    %15 = tpu.matmul %1, %4, %cst {dimension_numbers = #tpu.dot_dimension_numbers<[1], [0], [0], [1], [0, 0, 1, 1], [], []>} : vector<8x32xf32>, vector<32x256xf32>, vector<8x256xf32> -> vector<8x256xf32>
    %16 = vector.broadcast %7 : vector<1x256xf32> to vector<8x256xf32>
    %17 = arith.addf %15, %16 : vector<8x256xf32>
    %cst_19 = arith.constant dense<0.000000e+00> : vector<8x512xf32>
    %18 = tpu.matmul %3, %5, %cst_19 {dimension_numbers = #tpu.dot_dimension_numbers<[1], [0], [0], [1], [0, 0, 1, 1], [], []>} : vector<8x32xf32>, vector<32x512xf32>, vector<8x512xf32> -> vector<8x512xf32>
    %19 = vector.broadcast %8 : vector<1x512xf32> to vector<8x512xf32>
    %20 = arith.addf %18, %19 : vector<8x512xf32>
    %21 = vector.extract_strided_slice %20 {offsets = [0, 0], sizes = [8, 256], strides = [1, 1]} : vector<8x512xf32> to vector<8x256xf32>
    %22 = vector.extract_strided_slice %20 {offsets = [0, 256], sizes = [8, 256], strides = [1, 1]} : vector<8x512xf32> to vector<8x256xf32>
    %23 = arith.mulf %17, %21 : vector<8x256xf32>
    %cst_20 = arith.constant dense<0.000000e+00> : vector<8x64xf32>
    %24 = tpu.matmul %23, %11, %cst_20 {dimension_numbers = #tpu.dot_dimension_numbers<[1], [0], [0], [1], [0, 0, 1, 1], [], []>} : vector<8x256xf32>, vector<256x64xf32>, vector<8x64xf32> -> vector<8x64xf32>
    %cst_21 = arith.constant dense<0xFF800000> : vector<8xf32>
    %25 = vector.multi_reduction <maximumf>, %24, %cst_21 [1] : vector<8x64xf32> to vector<8xf32>
    %26 = vector.shape_cast %25 : vector<8xf32> to vector<8x1xf32>
    %27 = vector.broadcast %26 : vector<8x1xf32> to vector<8x64xf32>
    %28 = arith.subf %24, %27 : vector<8x64xf32>
    %29 = math.exp %28 : vector<8x64xf32>
    %cst_22 = arith.constant dense<0.000000e+00> : vector<8x64xf32>
    %30 = tpu.matmul %29, %13, %cst_22 {dimension_numbers = #tpu.dot_dimension_numbers<[1], [0], [0], [1], [0, 0, 1, 1], [], []>} : vector<8x64xf32>, vector<64x64xf32>, vector<8x64xf32> -> vector<8x64xf32>
    %cst_23 = arith.constant 1.000000e-30 : f32
    %31 = vector.broadcast %cst_23 : f32 to vector<8x64xf32>
    %32 = arith.maximumf %30, %31 : vector<8x64xf32>
    %33 = tpu.reciprocal %32 {approx = true} : vector<8x64xf32> -> vector<8x64xf32>
    %34 = arith.mulf %29, %33 : vector<8x64xf32>
    %35 = tpu.concatenate %34, %34, %34, %34 in 1 : vector<8x64xf32>, vector<8x64xf32>, vector<8x64xf32>, vector<8x64xf32> -> vector<8x256xf32>
    %36 = arith.mulf %35, %22 : vector<8x256xf32>
    %cst_24 = arith.constant dense<0.000000e+00> : vector<8x32xf32>
    %37 = tpu.matmul %36, %12, %cst_24 {dimension_numbers = #tpu.dot_dimension_numbers<[1], [0], [0], [1], [0, 0, 1, 1], [], []>} : vector<8x256xf32>, vector<256x32xf32>, vector<8x32xf32> -> vector<8x32xf32>
    %38 = vector.broadcast %9 : vector<1x32xf32> to vector<8x32xf32>
    %39 = arith.addf %37, %38 : vector<8x32xf32>
    %40 = arith.mulf %39, %1 : vector<8x32xf32>
    %cst_25 = arith.constant dense<0.000000e+00> : vector<8x32xf32>
    %41 = tpu.matmul %40, %6, %cst_25 {dimension_numbers = #tpu.dot_dimension_numbers<[1], [0], [0], [1], [0, 0, 1, 1], [], []>} : vector<8x32xf32>, vector<32x32xf32>, vector<8x32xf32> -> vector<8x32xf32>
    %42 = vector.broadcast %9 : vector<1x32xf32> to vector<8x32xf32>
    %43 = arith.addf %41, %42 : vector<8x32xf32>
    %cst_26 = arith.constant dense<0.000000e+00> : vector<8xf32>
    %44 = vector.multi_reduction <add>, %43, %cst_26 [1] : vector<8x32xf32> to vector<8xf32>
    %45 = vector.shape_cast %44 : vector<8xf32> to vector<8x1xf32>
    %cst_27 = arith.constant 3.200000e+01 : f32
    %46 = vector.broadcast %cst_27 : f32 to vector<8x1xf32>
    %47 = arith.divf %45, %46 : vector<8x1xf32>
    %48 = arith.mulf %43, %43 : vector<8x32xf32>
    %cst_28 = arith.constant dense<0.000000e+00> : vector<8xf32>
    %49 = vector.multi_reduction <add>, %48, %cst_28 [1] : vector<8x32xf32> to vector<8xf32>
    %50 = vector.shape_cast %49 : vector<8xf32> to vector<8x1xf32>
    %cst_29 = arith.constant 3.200000e+01 : f32
    %51 = vector.broadcast %cst_29 : f32 to vector<8x1xf32>
    %52 = arith.divf %50, %51 : vector<8x1xf32>
    %53 = arith.mulf %47, %47 : vector<8x1xf32>
    %54 = arith.subf %52, %53 : vector<8x1xf32>
    %cst_30 = arith.constant 0.000000e+00 : f32
    %55 = vector.broadcast %cst_30 : f32 to vector<8x1xf32>
    %56 = arith.maximumf %54, %55 : vector<8x1xf32>
    %57 = vector.broadcast %47 : vector<8x1xf32> to vector<8x32xf32>
    %58 = arith.subf %43, %57 : vector<8x32xf32>
    %cst_31 = arith.constant 9.99999996E-13 : f32
    %59 = vector.broadcast %cst_31 : f32 to vector<8x1xf32>
    %60 = arith.addf %56, %59 : vector<8x1xf32>
    %61 = math.rsqrt %60 : vector<8x1xf32>
    %62 = vector.broadcast %61 : vector<8x1xf32> to vector<8x32xf32>
    %63 = arith.mulf %58, %62 : vector<8x32xf32>
    %cst_32 = arith.constant -4.000000e+00 : f32
    %64 = vector.broadcast %cst_32 : f32 to vector<8x32xf32>
    %65 = arith.mulf %64, %1 : vector<8x32xf32>
    %66 = arith.addf %3, %65 : vector<8x32xf32>
    %67 = tpu.concatenate %66, %63 in 1 : vector<8x32xf32>, vector<8x32xf32> -> vector<8x64xf32>
    %cst_33 = arith.constant dense<0.000000e+00> : vector<8x32xf32>
    %68 = tpu.matmul %67, %14, %cst_33 {dimension_numbers = #tpu.dot_dimension_numbers<[1], [0], [0], [1], [0, 0, 1, 1], [], []>} : vector<8x64xf32>, vector<64x32xf32>, vector<8x32xf32> -> vector<8x32xf32>
    %69 = vector.broadcast %10 : vector<1x32xf32> to vector<8x32xf32>
    %70 = arith.addf %68, %69 : vector<8x32xf32>
    %c0_34 = arith.constant 0 : index
    %c0_35 = arith.constant 0 : index
    %71 = vector.load %arg4[%c0_34, %c0_35] : memref<8x32xf32, #tpu.memory_space<vmem>>, vector<8x32xf32>
    tpu.vector_store %arg4[%c0_34, %c0_35], %70 {strides = array<i32>} : memref<8x32xf32, #tpu.memory_space<vmem>>, vector<8x32xf32>,
    return
  }
  func.func @transform_0(%arg0: i32) -> (i32, i32, i32) {
    %c0_i32 = arith.constant 0 : i32
    %c0_i32_0 = arith.constant 0 : i32
    %c0_i32_1 = arith.constant 0 : i32
    return %c0_i32, %arg0, %c0_i32_0 : i32, i32, i32
  }
  func.func @transform_1(%arg0: i32) -> (i32, i32) {
    %c0_i32 = arith.constant 0 : i32
    %c0_i32_0 = arith.constant 0 : i32
    %c0_i32_1 = arith.constant 0 : i32
    return %c0_i32, %c0_i32_0 : i32, i32
  }
  func.func @transform_2(%arg0: i32) -> (i32, i32) {
    %c0_i32 = arith.constant 0 : i32
    %c0_i32_0 = arith.constant 0 : i32
    %c0_i32_1 = arith.constant 0 : i32
    return %c0_i32, %c0_i32_0 : i32, i32
  }
  func.func @transform_3(%arg0: i32) -> (i32, i32) {
    %c0_i32 = arith.constant 0 : i32
    %c0_i32_0 = arith.constant 0 : i32
    return %arg0, %c0_i32 : i32, i32
  }
}

</mosaic_0001>

<llo_original>
// kernel: tpu_custom_call.1
$region0: #{tpu_custom_call.1}
  #allocation0 [shape = 'u32[]', space=smem, size = 0x4, offset = 0x4, fixed_abs, tag = 'smem constant byte address 0x4 - core index']
  #allocation1 [shape = 'u32[144,128]{1,0:T(1,128)}', space=vmem, size = 0x12000, scoped, tag = 'internal scratch']
  %s0 = inlined_call_operand.vmem [shape: f32[2,8,32], index: 0, kind: input, shape index: {}]
  %s1 = inlined_call_operand.vmem [shape: f32[40,800], index: 1, kind: input, shape index: {}]
  %s2 = inlined_call_operand.vmem [shape: f32[320,160], index: 2, kind: input, shape index: {}]
  %s3 = inlined_call_operand.hbm [shape: f32[8,32], index: 3, kind: output, shape index: {}]
  %s4 = sld [smem:[#allocation0]]
  $region22: #{tpu_custom_call.1} parent=0
    _
  %s6 = ssub.s32 1, %s4
  %s7 = scalar_select 0, %s6, %s4
  $region1: #{tpu_custom_call.1} parent=0
    #allocation2 [shape = 'u8[4096]{0}', space=vmem, size = 0x1000, scoped, tag = 'output window, operand 0, single buffered']
    #allocation3 [shape = 's32[1]{0}', space=sflag, size = 0x4, scoped, tag = 'scoped memory for tpu_custom_call.1']
    %8 = vsyncpa [#allocation3], 0
    // Predicated region
    $region2: #{tpu_custom_call.1} parent=1 // pred_check
      _
    $region3: #{tpu_custom_call.1} parent=1 // pred_check_branch
      %10 = sbr.rel (0) target = $region5
    $region4: #{tpu_custom_call.1} parent=1 // pred_region
      _
    $region5: #{tpu_custom_call.1} parent=1 // pred_fallthru
      _
    // Predicated region
    $region6: #{tpu_custom_call.1} parent=1 // pred_check
      _
    $region7: #{tpu_custom_call.1} parent=1 // pred_check_branch
      %12 = sbr.rel (0) target = $region9
    $region8: #{tpu_custom_call.1} parent=1 // pred_region
      _
    $region9: #{tpu_custom_call.1} parent=1 // pred_fallthru
      _
    // Predicated region
    $region10: #{tpu_custom_call.1} parent=1 // pred_check
      _
    $region11: #{tpu_custom_call.1} parent=1 // pred_check_branch
      %14 = sbr.rel (0) target = $region13
    $region12: #{tpu_custom_call.1} parent=1 // pred_region
      _
    $region13: #{tpu_custom_call.1} parent=1 // pred_fallthru
      _
    %v15 = vld [vmem:[%s0] sm:$0xff]
    %s16 = scalar_lea.vmem %s0, 8
    %v17 = vld [vmem:[%s16] sm:$0xff]
    %v18 = vld [vmem:[%s1] sm:$0xff]
    %v19 = vld [vmem:[%s1 + $0x8] sm:$0xff]
    %v20 = vld [vmem:[%s1 + $0x38] sm:$0xff]
    %v21 = vld [vmem:[%s1 + $0x40] sm:$0xff]
    %v22 = vld [vmem:[%s1 + $0x70] sm:$0xff]
    %v23 = vld [vmem:[%s1 + $0x78] sm:$0xff]
    %v24 = vld [vmem:[%s1 + $0xa8] sm:$0xff]
    %v25 = vld [vmem:[%s1 + $0xb0] sm:$0xff]
    %v26 = vld [vmem:[%s1 + $0x10] sm:$0xff]
    %v27 = vld [vmem:[%s1 + $0x18] sm:$0xff]
    %v28 = vld [vmem:[%s1 + $0x20] sm:$0xff]
    %v29 = vld [vmem:[%s1 + $0x28] sm:$0xff]
    %v30 = vld [vmem:[%s1 + $0x48] sm:$0xff]
    %v31 = vld [vmem:[%s1 + $0x50] sm:$0xff]
    %v32 = vld [vmem:[%s1 + $0x58] sm:$0xff]
    %v33 = vld [vmem:[%s1 + $0x60] sm:$0xff]
    %v34 = vld [vmem:[%s1 + $0x80] sm:$0xff]
    %v35 = vld [vmem:[%s1 + $0x88] sm:$0xff]
    %v36 = vld [vmem:[%s1 + $0x90] sm:$0xff]
    %v37 = vld [vmem:[%s1 + $0x98] sm:$0xff]
    %v38 = vld [vmem:[%s1 + $0xb8] sm:$0xff]
    %v39 = vld [vmem:[%s1 + $0xc0] sm:$0xff]
    %v40 = vld [vmem:[%s1 + $0xc8] sm:$0xff]
    %v41 = vld [vmem:[%s1 + $0xd0] sm:$0xff]
    %v42 = vld [vmem:[%s1 + $0x30] sm:$0xff]
    %v43 = vld [vmem:[%s1 + $0x68] sm:$0xff]
    %v44 = vld [vmem:[%s1 + $0xa0] sm:$0xff]
    %v45 = vld [vmem:[%s1 + $0xd8] sm:$0xff]
    %s46 = scalar_lea.vmem %s1, 224
    %v47 = vld [vmem:[%s46] ss:$8 sm:$0x3]
    %s48 = scalar_lea.vmem %s1, 225
    %v49 = vld [vmem:[%s48] ss:$8 sm:$0xf]
    %v50 = vld [vmem:[%s1 + $0xe2] ss:$0 sm:$0xff]
    %v51 = vld [vmem:[%s1 + $0xe3] ss:$0 sm:$0xff]
    %v52 = vld [vmem:[%s2] sm:$0xff]
    %v53 = vld [vmem:[%s2 + $0x10] sm:$0xff]
    %v54 = vld [vmem:[%s2 + $0x20] sm:$0xff]
    %v55 = vld [vmem:[%s2 + $0x30] sm:$0xff]
    %v56 = vld [vmem:[%s2 + $0x40] sm:$0xff]
    %v57 = vld [vmem:[%s2 + $0x50] sm:$0xff]
    %v58 = vld [vmem:[%s2 + $0x60] sm:$0xff]
    %v59 = vld [vmem:[%s2 + $0x70] sm:$0xff]
    %v60 = vld [vmem:[%s2 + $0x80] sm:$0xff]
    %v61 = vld [vmem:[%s2 + $0x90] sm:$0xff]
    %v62 = vld [vmem:[%s2 + $0xa0] sm:$0xff]
    %v63 = vld [vmem:[%s2 + $0xb0] sm:$0xff]
    %v64 = vld [vmem:[%s2 + $0xc0] sm:$0xff]
    %v65 = vld [vmem:[%s2 + $0xd0] sm:$0xff]
    %v66 = vld [vmem:[%s2 + $0xe0] sm:$0xff]
    %v67 = vld [vmem:[%s2 + $0xf0] sm:$0xff]
    %v68 = vld [vmem:[%s2 + $0x100] sm:$0xff]
    %v69 = vld [vmem:[%s2 + $0x110] sm:$0xff]
    %v70 = vld [vmem:[%s2 + $0x120] sm:$0xff]
    %v71 = vld [vmem:[%s2 + $0x130] sm:$0xff]
    %v72 = vld [vmem:[%s2 + $0x140] sm:$0xff]
    %v73 = vld [vmem:[%s2 + $0x150] sm:$0xff]
    %v74 = vld [vmem:[%s2 + $0x160] sm:$0xff]
    %v75 = vld [vmem:[%s2 + $0x170] sm:$0xff]
    %v76 = vld [vmem:[%s2 + $0x180] sm:$0xff]
    %v77 = vld [vmem:[%s2 + $0x190] sm:$0xff]
    %v78 = vld [vmem:[%s2 + $0x1a0] sm:$0xff]
    %v79 = vld [vmem:[%s2 + $0x1b0] sm:$0xff]
    %v80 = vld [vmem:[%s2 + $0x1c0] sm:$0xff]
    %v81 = vld [vmem:[%s2 + $0x1d0] sm:$0xff]
    %v82 = vld [vmem:[%s2 + $0x1e0] sm:$0xff]
    %v83 = vld [vmem:[%s2 + $0x1f0] sm:$0xff]
    %v84 = vld [vmem:[%s2 + $0x8] sm:$0xff]
    %v85 = vld [vmem:[%s2 + $0x18] sm:$0xff]
    %v86 = vld [vmem:[%s2 + $0x28] sm:$0xff]
    %v87 = vld [vmem:[%s2 + $0x38] sm:$0xff]
    %v88 = vld [vmem:[%s2 + $0x48] sm:$0xff]
    %v89 = vld [vmem:[%s2 + $0x58] sm:$0xff]
    %v90 = vld [vmem:[%s2 + $0x68] sm:$0xff]
    %v91 = vld [vmem:[%s2 + $0x78] sm:$0xff]
    %v92 = vld [vmem:[%s2 + $0x88] sm:$0xff]
    %v93 = vld [vmem:[%s2 + $0x98] sm:$0xff]
    %v94 = vld [vmem:[%s2 + $0xa8] sm:$0xff]
    %v95 = vld [vmem:[%s2 + $0xb8] sm:$0xff]
    %v96 = vld [vmem:[%s2 + $0xc8] sm:$0xff]
    %v97 = vld [vmem:[%s2 + $0xd8] sm:$0xff]
    %v98 = vld [vmem:[%s2 + $0xe8] sm:$0xff]
    %v99 = vld [vmem:[%s2 + $0xf8] sm:$0xff]
    %v100 = vld [vmem:[%s2 + $0x108] sm:$0xff]
    %v101 = vld [vmem:[%s2 + $0x118] sm:$0xff]
    %v102 = vld [vmem:[%s2 + $0x128] sm:$0xff]
    %v103 = vld [vmem:[%s2 + $0x138] sm:$0xff]
    %v104 = vld [vmem:[%s2 + $0x148] sm:$0xff]
    %v105 = vld [vmem:[%s2 + $0x158] sm:$0xff]
    %v106 = vld [vmem:[%s2 + $0x168] sm:$0xff]
    %v107 = vld [vmem:[%s2 + $0x178] sm:$0xff]
    %v108 = vld [vmem:[%s2 + $0x188] sm:$0xff]
    %v109 = vld [vmem:[%s2 + $0x198] sm:$0xff]
    %v110 = vld [vmem:[%s2 + $0x1a8] sm:$0xff]
    %v111 = vld [vmem:[%s2 + $0x1b8] sm:$0xff]
    %v112 = vld [vmem:[%s2 + $0x1c8] sm:$0xff]
    %v113 = vld [vmem:[%s2 + $0x1d8] sm:$0xff]
    %v114 = vld [vmem:[%s2 + $0x1e8] sm:$0xff]
    %v115 = vld [vmem:[%s2 + $0x1f8] sm:$0xff]
    %v116 = vld [vmem:[%s2 + $0x200] sm:$0xff]
    %v117 = vld [vmem:[%s2 + $0x210] sm:$0xff]
    %v118 = vld [vmem:[%s2 + $0x220] sm:$0xff]
    %v119 = vld [vmem:[%s2 + $0x230] sm:$0xff]
    %v120 = vld [vmem:[%s2 + $0x240] sm:$0xff]
    %v121 = vld [vmem:[%s2 + $0x250] sm:$0xff]
    %v122 = vld [vmem:[%s2 + $0x260] sm:$0xff]
    %v123 = vld [vmem:[%s2 + $0x270] sm:$0xff]
    %v124 = vld [vmem:[%s2 + $0x208] sm:$0xff]
    %v125 = vld [vmem:[%s2 + $0x218] sm:$0xff]
    %v126 = vld [vmem:[%s2 + $0x228] sm:$0xff]
    %v127 = vld [vmem:[%s2 + $0x238] sm:$0xff]
    %v128 = vld [vmem:[%s2 + $0x248] sm:$0xff]
    %v129 = vld [vmem:[%s2 + $0x258] sm:$0xff]
    %v130 = vld [vmem:[%s2 + $0x268] sm:$0xff]
    %v131 = vld [vmem:[%s2 + $0x278] sm:$0xff]
    %v133 = vlaneseq
    %v134 = vshrl.u32 %v133, 7
    %v135 = vsub.s32 0, %v134
    %v136 = vrot.slane %v47, %v135
    %v137 = vlaneseq
    %v138 = vshrl.u32 %v137, 7
    %v139 = vsub.s32 1, %v138
    %v140 = vrot.slane %v47, %v139
    %vm143 = vcmask 261120
    %v145 = vsel %vm143, %v15, 0
    %147 = vmatprep.subr.mxu0 %v19
    %148 = vmatpush1.msra.mxu0 %v18
    %149 = vmatprep.subr.mxu0 %v21
    %150 = vmatpush1.msra.mxu0 %v20
    %151 = vmatprep.subr.mxu0 %v23
    %152 = vmatpush1.msra.mxu0 %v22
    %153 = vmatprep.subr.mxu0 %v25
    %154 = vmatpush1.msra.mxu0 %v24
    %155 = vmatprep.subr.mxu0 0.0
    %156 = vmatpush1.msra.mxu0 0.0
    %157 = vmatprep.subr.mxu0 0.0
    %158 = vmatpush1.msra.mxu0 0.0
    %159 = vmatprep.subr.mxu0 0.0
    %160 = vmatpush1.msra.mxu0 0.0
    %161 = vmatprep.subr.mxu0 0.0
    %162 = vmatpush1.msra.mxu0 0.0
    %163 = vmatprep.subr.mxu0 0.0
    %164 = vmatpush1.msra.mxu0 0.0
    %165 = vmatprep.subr.mxu0 0.0
    %166 = vmatpush1.msra.mxu0 0.0
    %167 = vmatprep.subr.mxu0 0.0
    %168 = vmatpush1.msra.mxu0 0.0
    %169 = vmatprep.subr.mxu0 0.0
    %170 = vmatpush1.msra.mxu0 0.0
    %171 = vmatprep.subr.mxu0 0.0
    %172 = vmatpush1.msra.mxu0 0.0
    %173 = vmatprep.subr.mxu0 0.0
    %174 = vmatpush1.msra.mxu0 0.0
    %175 = vmatprep.subr.mxu0 0.0
    %176 = vmatpush1.msra.mxu0 0.0
    %177 = vmatprep.subr.mxu0 0.0
    %178 = vmatpush1.msra.mxu0 0.0
    %179 = vmatprep.subr.mxu0 0.0
    %180 = vmatpush1.msra.mxu0 0.0
    %181 = vmatprep.subr.mxu0 0.0
    %182 = vmatpush1.msra.mxu0 0.0
    %183 = vmatprep.subr.mxu0 0.0
    %184 = vmatpush1.msra.mxu0 0.0
    %185 = vmatprep.subr.mxu0 0.0
    %186 = vmatpush1.msra.mxu0 0.0
    %187 = vmatprep.subr.mxu0 0.0
    %188 = vmatpush1.msra.mxu0 0.0
    %189 = vmatprep.subr.mxu0 0.0
    %190 = vmatpush1.msra.mxu0 0.0
    %191 = vmatprep.subr.mxu0 0.0
    %192 = vmatpush1.msra.mxu0 0.0
    %193 = vmatprep.subr.mxu0 0.0
    %194 = vmatpush1.msra.mxu0 0.0
    %195 = vmatprep.subr.mxu0 0.0
    %196 = vmatpush1.msra.mxu0 0.0
    %197 = vmatprep.subr.mxu0 0.0
    %198 = vmatpush1.msra.mxu0 0.0
    %199 = vmatprep.subr.mxu0 0.0
    %200 = vmatpush1.msra.mxu0 0.0
    %201 = vmatprep.subr.mxu0 0.0
    %202 = vmatpush1.msra.mxu0 0.0
    %203 = vmatprep.subr.mxu0 0.0
    %204 = vmatpush1.msra.mxu0 0.0
    %205 = vmatprep.subr.mxu0 0.0
    %206 = vmatpush1.msra.mxu0 0.0
    %207 = vmatprep.subr.mxu0 0.0
    %208 = vmatpush1.msra.mxu0 0.0
    %209 = vmatprep.subr.mxu0 0.0
    %210 = vmatpush1.msra.mxu0 0.0
    %211 = vmatprep.mubr.f32.mxu0 0.0
    %212 = vmatmul.mubr.f32.gmra.mrb[0].mxu0 %v145
    %v213 = vpop.f32.mrb[0].mxu0
    %v214 = vadd.f32 %v136, %v213
    %v215 = vpop.f32.mrb[0].mxu0
    %v216 = vadd.f32 %v140, %v215
    %217 = vdwg.mxu0
    %v219 = vlaneseq
    %v220 = vshrl.u32 %v219, 7
    %v221 = vsub.s32 0, %v220
    %v222 = vrot.slane %v49, %v221
    %v223 = vlaneseq
    %v224 = vshrl.u32 %v223, 7
    %v225 = vsub.s32 1, %v224
    %v226 = vrot.slane %v49, %v225
    %v227 = vlaneseq
    %v228 = vshrl.u32 %v227, 7
    %v229 = vsub.s32 2, %v228
    %v230 = vrot.slane %v49, %v229
    %v231 = vlaneseq
    %v232 = vshrl.u32 %v231, 7
    %v233 = vsub.s32 3, %v232
    %v234 = vrot.slane %v49, %v233
    %v240 = vsel %vm143, %v17, 0
    %242 = vmatprep.subr.mxu0 %v27
    %243 = vmatpush1.msra.mxu0 %v26
    %244 = vmatprep.subr.mxu0 %v31
    %245 = vmatpush1.msra.mxu0 %v30
    %246 = vmatprep.subr.mxu0 %v35
    %247 = vmatpush1.msra.mxu0 %v34
    %248 = vmatprep.subr.mxu0 %v39
    %249 = vmatpush1.msra.mxu0 %v38
    %250 = vmatprep.subr.mxu0 0.0
    %251 = vmatpush1.msra.mxu0 0.0
    %252 = vmatprep.subr.mxu0 0.0
    %253 = vmatpush1.msra.mxu0 0.0
    %254 = vmatprep.subr.mxu0 0.0
    %255 = vmatpush1.msra.mxu0 0.0
    %256 = vmatprep.subr.mxu0 0.0
    %257 = vmatpush1.msra.mxu0 0.0
    %258 = vmatprep.subr.mxu0 0.0
    %259 = vmatpush1.msra.mxu0 0.0
    %260 = vmatprep.subr.mxu0 0.0
    %261 = vmatpush1.msra.mxu0 0.0
    %262 = vmatprep.subr.mxu0 0.0
    %263 = vmatpush1.msra.mxu0 0.0
    %264 = vmatprep.subr.mxu0 0.0
    %265 = vmatpush1.msra.mxu0 0.0
    %266 = vmatprep.subr.mxu0 0.0
    %267 = vmatpush1.msra.mxu0 0.0
    %268 = vmatprep.subr.mxu0 0.0
    %269 = vmatpush1.msra.mxu0 0.0
    %270 = vmatprep.subr.mxu0 0.0
    %271 = vmatpush1.msra.mxu0 0.0
    %272 = vmatprep.subr.mxu0 0.0
    %273 = vmatpush1.msra.mxu0 0.0
    %274 = vmatprep.subr.mxu0 0.0
    %275 = vmatpush1.msra.mxu0 0.0
    %276 = vmatprep.subr.mxu0 0.0
    %277 = vmatpush1.msra.mxu0 0.0
    %278 = vmatprep.subr.mxu0 0.0
    %279 = vmatpush1.msra.mxu0 0.0
    %280 = vmatprep.subr.mxu0 0.0
    %281 = vmatpush1.msra.mxu0 0.0
    %282 = vmatprep.subr.mxu0 0.0
    %283 = vmatpush1.msra.mxu0 0.0
    %284 = vmatprep.subr.mxu0 0.0
    %285 = vmatpush1.msra.mxu0 0.0
    %286 = vmatprep.subr.mxu0 0.0
    %287 = vmatpush1.msra.mxu0 0.0
    %288 = vmatprep.subr.mxu0 0.0
    %289 = vmatpush1.msra.mxu0 0.0
    %290 = vmatprep.subr.mxu0 0.0
    %291 = vmatpush1.msra.mxu0 0.0
    %292 = vmatprep.subr.mxu0 0.0
    %293 = vmatpush1.msra.mxu0 0.0
    %294 = vmatprep.subr.mxu0 0.0
    %295 = vmatpush1.msra.mxu0 0.0
    %296 = vmatprep.subr.mxu0 0.0
    %297 = vmatpush1.msra.mxu0 0.0
    %298 = vmatprep.subr.mxu0 0.0
    %299 = vmatpush1.msra.mxu0 0.0
    %300 = vmatprep.subr.mxu0 0.0
    %301 = vmatpush1.msra.mxu0 0.0
    %302 = vmatprep.subr.mxu0 0.0
    %303 = vmatpush1.msra.mxu0 0.0
    %304 = vmatprep.subr.mxu0 0.0
    %305 = vmatpush1.msra.mxu0 0.0
    %306 = vmatprep.mubr.f32.mxu0 0.0
    %307 = vmatmul.mubr.f32.gmra.mrb[0].mxu0 %v240
    %v308 = vpop.f32.mrb[0].mxu0
    %v309 = vadd.f32 %v222, %v308
    %v310 = vpop.f32.mrb[0].mxu0
    %v311 = vadd.f32 %v226, %v310
    %312 = vdwg.mxu0
    %313 = vmatprep.subr.mxu0 %v29
    %314 = vmatpush1.msra.mxu0 %v28
    %315 = vmatprep.subr.mxu0 %v33
    %316 = vmatpush1.msra.mxu0 %v32
    %317 = vmatprep.subr.mxu0 %v37
    %318 = vmatpush1.msra.mxu0 %v36
    %319 = vmatprep.subr.mxu0 %v41
    %320 = vmatpush1.msra.mxu0 %v40
    %321 = vmatprep.subr.mxu0 0.0
    %322 = vmatpush1.msra.mxu0 0.0
    %323 = vmatprep.subr.mxu0 0.0
    %324 = vmatpush1.msra.mxu0 0.0
    %325 = vmatprep.subr.mxu0 0.0
    %326 = vmatpush1.msra.mxu0 0.0
    %327 = vmatprep.subr.mxu0 0.0
    %328 = vmatpush1.msra.mxu0 0.0
    %329 = vmatprep.subr.mxu0 0.0
    %330 = vmatpush1.msra.mxu0 0.0
    %331 = vmatprep.subr.mxu0 0.0
    %332 = vmatpush1.msra.mxu0 0.0
    %333 = vmatprep.subr.mxu0 0.0
    %334 = vmatpush1.msra.mxu0 0.0
    %335 = vmatprep.subr.mxu0 0.0
    %336 = vmatpush1.msra.mxu0 0.0
    %337 = vmatprep.subr.mxu0 0.0
    %338 = vmatpush1.msra.mxu0 0.0
    %339 = vmatprep.subr.mxu0 0.0
    %340 = vmatpush1.msra.mxu0 0.0
    %341 = vmatprep.subr.mxu0 0.0
    %342 = vmatpush1.msra.mxu0 0.0
    %343 = vmatprep.subr.mxu0 0.0
    %344 = vmatpush1.msra.mxu0 0.0
    %345 = vmatprep.subr.mxu0 0.0
    %346 = vmatpush1.msra.mxu0 0.0
    %347 = vmatprep.subr.mxu0 0.0
    %348 = vmatpush1.msra.mxu0 0.0
    %349 = vmatprep.subr.mxu0 0.0
    %350 = vmatpush1.msra.mxu0 0.0
    %351 = vmatprep.subr.mxu0 0.0
    %352 = vmatpush1.msra.mxu0 0.0
    %353 = vmatprep.subr.mxu0 0.0
    %354 = vmatpush1.msra.mxu0 0.0
    %355 = vmatprep.subr.mxu0 0.0
    %356 = vmatpush1.msra.mxu0 0.0
    %357 = vmatprep.subr.mxu0 0.0
    %358 = vmatpush1.msra.mxu0 0.0
    %359 = vmatprep.subr.mxu0 0.0
    %360 = vmatpush1.msra.mxu0 0.0
    %361 = vmatprep.subr.mxu0 0.0
    %362 = vmatpush1.msra.mxu0 0.0
    %363 = vmatprep.subr.mxu0 0.0
    %364 = vmatpush1.msra.mxu0 0.0
    %365 = vmatprep.subr.mxu0 0.0
    %366 = vmatpush1.msra.mxu0 0.0
    %367 = vmatprep.subr.mxu0 0.0
    %368 = vmatpush1.msra.mxu0 0.0
    %369 = vmatprep.subr.mxu0 0.0
    %370 = vmatpush1.msra.mxu0 0.0
    %371 = vmatprep.subr.mxu0 0.0
    %372 = vmatpush1.msra.mxu0 0.0
    %373 = vmatprep.subr.mxu0 0.0
    %374 = vmatpush1.msra.mxu0 0.0
    %375 = vmatprep.subr.mxu0 0.0
    %376 = vmatpush1.msra.mxu0 0.0
    %377 = vmatprep.mubr.f32.mxu0 0.0
    %378 = vmatmul.mubr.f32.gmra.mrb[0].mxu0 %v240
    %v379 = vpop.f32.mrb[0].mxu0
    %v380 = vadd.f32 %v230, %v379
    %v381 = vpop.f32.mrb[0].mxu0
    %v382 = vadd.f32 %v234, %v381
    %383 = vdwg.mxu0
    %v384 = vmul.f32 %v214, %v309
    %v385 = vmul.f32 %v216, %v311
    %386 = vmatprep.subr.mxu0 0.0
    %387 = vmatpush1.msra.mxu0 %v52
    %388 = vmatprep.subr.mxu0 0.0
    %389 = vmatpush1.msra.mxu0 %v53
    %390 = vmatprep.subr.mxu0 0.0
    %391 = vmatpush1.msra.mxu0 %v54
    %392 = vmatprep.subr.mxu0 0.0
    %393 = vmatpush1.msra.mxu0 %v55
    %394 = vmatprep.subr.mxu0 0.0
    %395 = vmatpush1.msra.mxu0 %v56
    %396 = vmatprep.subr.mxu0 0.0
    %397 = vmatpush1.msra.mxu0 %v57
    %398 = vmatprep.subr.mxu0 0.0
    %399 = vmatpush1.msra.mxu0 %v58
    %400 = vmatprep.subr.mxu0 0.0
    %401 = vmatpush1.msra.mxu0 %v59
    %402 = vmatprep.subr.mxu0 0.0
    %403 = vmatpush1.msra.mxu0 %v60
    %404 = vmatprep.subr.mxu0 0.0
    %405 = vmatpush1.msra.mxu0 %v61
    %406 = vmatprep.subr.mxu0 0.0
    %407 = vmatpush1.msra.mxu0 %v62
    %408 = vmatprep.subr.mxu0 0.0
    %409 = vmatpush1.msra.mxu0 %v63
    %410 = vmatprep.subr.mxu0 0.0
    %411 = vmatpush1.msra.mxu0 %v64
    %412 = vmatprep.subr.mxu0 0.0
    %413 = vmatpush1.msra.mxu0 %v65
    %414 = vmatprep.subr.mxu0 0.0
    %415 = vmatpush1.msra.mxu0 %v66
    %416 = vmatprep.subr.mxu0 0.0
    %417 = vmatpush1.msra.mxu0 %v67
    %418 = vmatprep.subr.mxu0 0.0
    %419 = vmatpush1.msra.mxu0 %v68
    %420 = vmatprep.subr.mxu0 0.0
    %421 = vmatpush1.msra.mxu0 %v69
    %422 = vmatprep.subr.mxu0 0.0
    %423 = vmatpush1.msra.mxu0 %v70
    %424 = vmatprep.subr.mxu0 0.0
    %425 = vmatpush1.msra.mxu0 %v71
    %426 = vmatprep.subr.mxu0 0.0
    %427 = vmatpush1.msra.mxu0 %v72
    %428 = vmatprep.subr.mxu0 0.0
    %429 = vmatpush1.msra.mxu0 %v73
    %430 = vmatprep.subr.mxu0 0.0
    %431 = vmatpush1.msra.mxu0 %v74
    %432 = vmatprep.subr.mxu0 0.0
    %433 = vmatpush1.msra.mxu0 %v75
    %434 = vmatprep.subr.mxu0 0.0
    %435 = vmatpush1.msra.mxu0 %v76
    %436 = vmatprep.subr.mxu0 0.0
    %437 = vmatpush1.msra.mxu0 %v77
    %438 = vmatprep.subr.mxu0 0.0
    %439 = vmatpush1.msra.mxu0 %v78
    %440 = vmatprep.subr.mxu0 0.0
    %441 = vmatpush1.msra.mxu0 %v79
    %442 = vmatprep.subr.mxu0 0.0
    %443 = vmatpush1.msra.mxu0 %v80
    %444 = vmatprep.subr.mxu0 0.0
    %445 = vmatpush1.msra.mxu0 %v81
    %446 = vmatprep.subr.mxu0 0.0
    %447 = vmatpush1.msra.mxu0 %v82
    %448 = vmatprep.subr.mxu0 0.0
    %449 = vmatpush1.msra.mxu0 %v83
    %450 = vmatprep.mubr.f32.mxu0 %v385
    %451 = vmatmul.mubr.f32.gmra.mrb[0].mxu0 %v384
    %v452 = vpop.f32.mrb[0].mxu0
    %v453 = vadd.f32 0.0, %v452
    %v454 = vpop.f32.mrb[0].mxu0
    %455 = vdwg.mxu0
    %vm456 = vcmask 523264
    %v457 = vsel %vm456, %v453, -inf
    %458 = vmax.xlane.f32.xlu0 %v457
    %v459 = vpop.xlane.xlu0 %458
    %v460 = vsub.f32 %v453, %v459
    %v461 = vmul.f32 %v460, 1.442695
    %v462 = vpow.pop %v461
    %v464 = vsel %vm456, %v462, 0
    %466 = vmatprep.subr.mxu0 0.0
    %467 = vmatpush1.msra.mxu0 %v116
    %468 = vmatprep.subr.mxu0 0.0
    %469 = vmatpush1.msra.mxu0 %v117
    %470 = vmatprep.subr.mxu0 0.0
    %471 = vmatpush1.msra.mxu0 %v118
    %472 = vmatprep.subr.mxu0 0.0
    %473 = vmatpush1.msra.mxu0 %v119
    %474 = vmatprep.subr.mxu0 0.0
    %475 = vmatpush1.msra.mxu0 %v120
    %476 = vmatprep.subr.mxu0 0.0
    %477 = vmatpush1.msra.mxu0 %v121
    %478 = vmatprep.subr.mxu0 0.0
    %479 = vmatpush1.msra.mxu0 %v122
    %480 = vmatprep.subr.mxu0 0.0
    %481 = vmatpush1.msra.mxu0 %v123
    %482 = vmatprep.subr.mxu0 0.0
    %483 = vmatpush1.msra.mxu0 0.0
    %484 = vmatprep.subr.mxu0 0.0
    %485 = vmatpush1.msra.mxu0 0.0
    %486 = vmatprep.subr.mxu0 0.0
    %487 = vmatpush1.msra.mxu0 0.0
    %488 = vmatprep.subr.mxu0 0.0
    %489 = vmatpush1.msra.mxu0 0.0
    %490 = vmatprep.subr.mxu0 0.0
    %491 = vmatpush1.msra.mxu0 0.0
    %492 = vmatprep.subr.mxu0 0.0
    %493 = vmatpush1.msra.mxu0 0.0
    %494 = vmatprep.subr.mxu0 0.0
    %495 = vmatpush1.msra.mxu0 0.0
    %496 = vmatprep.subr.mxu0 0.0
    %497 = vmatpush1.msra.mxu0 0.0
    %498 = vmatprep.subr.mxu0 0.0
    %499 = vmatpush1.msra.mxu0 0.0
    %500 = vmatprep.subr.mxu0 0.0
    %501 = vmatpush1.msra.mxu0 0.0
    %502 = vmatprep.subr.mxu0 0.0
    %503 = vmatpush1.msra.mxu0 0.0
    %504 = vmatprep.subr.mxu0 0.0
    %505 = vmatpush1.msra.mxu0 0.0
    %506 = vmatprep.subr.mxu0 0.0
    %507 = vmatpush1.msra.mxu0 0.0
    %508 = vmatprep.subr.mxu0 0.0
    %509 = vmatpush1.msra.mxu0 0.0
    %510 = vmatprep.subr.mxu0 0.0
    %511 = vmatpush1.msra.mxu0 0.0
    %512 = vmatprep.subr.mxu0 0.0
    %513 = vmatpush1.msra.mxu0 0.0
    %514 = vmatprep.subr.mxu0 0.0
    %515 = vmatpush1.msra.mxu0 0.0
    %516 = vmatprep.subr.mxu0 0.0
    %517 = vmatpush1.msra.mxu0 0.0
    %518 = vmatprep.subr.mxu0 0.0
    %519 = vmatpush1.msra.mxu0 0.0
    %520 = vmatprep.subr.mxu0 0.0
    %521 = vmatpush1.msra.mxu0 0.0
    %522 = vmatprep.subr.mxu0 0.0
    %523 = vmatpush1.msra.mxu0 0.0
    %524 = vmatprep.subr.mxu0 0.0
    %525 = vmatpush1.msra.mxu0 0.0
    %526 = vmatprep.subr.mxu0 0.0
    %527 = vmatpush1.msra.mxu0 0.0
    %528 = vmatprep.subr.mxu0 0.0
    %529 = vmatpush1.msra.mxu0 0.0
    %530 = vmatprep.mubr.f32.mxu0 0.0
    %531 = vmatmul.mubr.f32.gmra.mrb[0].mxu0 %v464
    %v532 = vpop.f32.mrb[0].mxu0
    %v533 = vadd.f32 0.0, %v532
    %v534 = vpop.f32.mrb[0].mxu0
    %535 = vdwg.mxu0
    %v536 = vmax.f32 %v533, 1e-30
    %v537 = vrcp.pop %v536
    %v538 = vmul.f32 %v462, %v537
    %540 = vrot.lane.b32.xlu0 %v538, 64
    %v541 = vpop.permute.xlu0 %540
    %v543 = vsel %vm456, %v538, %v541
    %v544 = vmul.f32 %v543, %v380
    %v545 = vmul.f32 %v543, %v382
    %546 = vmatprep.subr.mxu0 0.0
    %547 = vmatpush1.msra.mxu0 %v84
    %548 = vmatprep.subr.mxu0 0.0
    %549 = vmatpush1.msra.mxu0 %v85
    %550 = vmatprep.subr.mxu0 0.0
    %551 = vmatpush1.msra.mxu0 %v86
    %552 = vmatprep.subr.mxu0 0.0
    %553 = vmatpush1.msra.mxu0 %v87
    %554 = vmatprep.subr.mxu0 0.0
    %555 = vmatpush1.msra.mxu0 %v88
    %556 = vmatprep.subr.mxu0 0.0
    %557 = vmatpush1.msra.mxu0 %v89
    %558 = vmatprep.subr.mxu0 0.0
    %559 = vmatpush1.msra.mxu0 %v90
    %560 = vmatprep.subr.mxu0 0.0
    %561 = vmatpush1.msra.mxu0 %v91
    %562 = vmatprep.subr.mxu0 0.0
    %563 = vmatpush1.msra.mxu0 %v92
    %564 = vmatprep.subr.mxu0 0.0
    %565 = vmatpush1.msra.mxu0 %v93
    %566 = vmatprep.subr.mxu0 0.0
    %567 = vmatpush1.msra.mxu0 %v94
    %568 = vmatprep.subr.mxu0 0.0
    %569 = vmatpush1.msra.mxu0 %v95
    %570 = vmatprep.subr.mxu0 0.0
    %571 = vmatpush1.msra.mxu0 %v96
    %572 = vmatprep.subr.mxu0 0.0
    %573 = vmatpush1.msra.mxu0 %v97
    %574 = vmatprep.subr.mxu0 0.0
    %575 = vmatpush1.msra.mxu0 %v98
    %576 = vmatprep.subr.mxu0 0.0
    %577 = vmatpush1.msra.mxu0 %v99
    %578 = vmatprep.subr.mxu0 0.0
    %579 = vmatpush1.msra.mxu0 %v100
    %580 = vmatprep.subr.mxu0 0.0
    %581 = vmatpush1.msra.mxu0 %v101
    %582 = vmatprep.subr.mxu0 0.0
    %583 = vmatpush1.msra.mxu0 %v102
    %584 = vmatprep.subr.mxu0 0.0
    %585 = vmatpush1.msra.mxu0 %v103
    %586 = vmatprep.subr.mxu0 0.0
    %587 = vmatpush1.msra.mxu0 %v104
    %588 = vmatprep.subr.mxu0 0.0
    %589 = vmatpush1.msra.mxu0 %v105
    %590 = vmatprep.subr.mxu0 0.0
    %591 = vmatpush1.msra.mxu0 %v106
    %592 = vmatprep.subr.mxu0 0.0
    %593 = vmatpush1.msra.mxu0 %v107
    %594 = vmatprep.subr.mxu0 0.0
    %595 = vmatpush1.msra.mxu0 %v108
    %596 = vmatprep.subr.mxu0 0.0
    %597 = vmatpush1.msra.mxu0 %v109
    %598 = vmatprep.subr.mxu0 0.0
    %599 = vmatpush1.msra.mxu0 %v110
    %600 = vmatprep.subr.mxu0 0.0
    %601 = vmatpush1.msra.mxu0 %v111
    %602 = vmatprep.subr.mxu0 0.0
    %603 = vmatpush1.msra.mxu0 %v112
    %604 = vmatprep.subr.mxu0 0.0
    %605 = vmatpush1.msra.mxu0 %v113
    %606 = vmatprep.subr.mxu0 0.0
    %607 = vmatpush1.msra.mxu0 %v114
    %608 = vmatprep.subr.mxu0 0.0
    %609 = vmatpush1.msra.mxu0 %v115
    %610 = vmatprep.mubr.f32.mxu0 %v545
    %611 = vmatmul.mubr.f32.gmra.mrb[0].mxu0 %v544
    %v612 = vpop.f32.mrb[0].mxu0
    %v613 = vadd.f32 %v50, %v612
    %v614 = vpop.f32.mrb[0].mxu0
    %615 = vdwg.mxu0
    %v616 = vmul.f32 %v613, %v15
    %v618 = vsel %vm143, %v616, 0
    %620 = vmatprep.subr.mxu0 0.0
    %621 = vmatpush1.msra.mxu0 %v42
    %622 = vmatprep.subr.mxu0 0.0
    %623 = vmatpush1.msra.mxu0 %v43
    %624 = vmatprep.subr.mxu0 0.0
    %625 = vmatpush1.msra.mxu0 %v44
    %626 = vmatprep.subr.mxu0 0.0
    %627 = vmatpush1.msra.mxu0 %v45
    %628 = vmatprep.subr.mxu0 0.0
    %629 = vmatpush1.msra.mxu0 0.0
    %630 = vmatprep.subr.mxu0 0.0
    %631 = vmatpush1.msra.mxu0 0.0
    %632 = vmatprep.subr.mxu0 0.0
    %633 = vmatpush1.msra.mxu0 0.0
    %634 = vmatprep.subr.mxu0 0.0
    %635 = vmatpush1.msra.mxu0 0.0
    %636 = vmatprep.subr.mxu0 0.0
    %637 = vmatpush1.msra.mxu0 0.0
    %638 = vmatprep.subr.mxu0 0.0
    %639 = vmatpush1.msra.mxu0 0.0
    %640 = vmatprep.subr.mxu0 0.0
    %641 = vmatpush1.msra.mxu0 0.0
    %642 = vmatprep.subr.mxu0 0.0
    %643 = vmatpush1.msra.mxu0 0.0
    %644 = vmatprep.subr.mxu0 0.0
    %645 = vmatpush1.msra.mxu0 0.0
    %646 = vmatprep.subr.mxu0 0.0
    %647 = vmatpush1.msra.mxu0 0.0
    %648 = vmatprep.subr.mxu0 0.0
    %649 = vmatpush1.msra.mxu0 0.0
    %650 = vmatprep.subr.mxu0 0.0
    %651 = vmatpush1.msra.mxu0 0.0
    %652 = vmatprep.subr.mxu0 0.0
    %653 = vmatpush1.msra.mxu0 0.0
    %654 = vmatprep.subr.mxu0 0.0
    %655 = vmatpush1.msra.mxu0 0.0
    %656 = vmatprep.subr.mxu0 0.0
    %657 = vmatpush1.msra.mxu0 0.0
    %658 = vmatprep.subr.mxu0 0.0
    %659 = vmatpush1.msra.mxu0 0.0
    %660 = vmatprep.subr.mxu0 0.0
    %661 = vmatpush1.msra.mxu0 0.0
    %662 = vmatprep.subr.mxu0 0.0
    %663 = vmatpush1.msra.mxu0 0.0
    %664 = vmatprep.subr.mxu0 0.0
    %665 = vmatpush1.msra.mxu0 0.0
    %666 = vmatprep.subr.mxu0 0.0
    %667 = vmatpush1.msra.mxu0 0.0
    %668 = vmatprep.subr.mxu0 0.0
    %669 = vmatpush1.msra.mxu0 0.0
    %670 = vmatprep.subr.mxu0 0.0
    %671 = vmatpush1.msra.mxu0 0.0
    %672 = vmatprep.subr.mxu0 0.0
    %673 = vmatpush1.msra.mxu0 0.0
    %674 = vmatprep.subr.mxu0 0.0
    %675 = vmatpush1.msra.mxu0 0.0
    %676 = vmatprep.subr.mxu0 0.0
    %677 = vmatpush1.msra.mxu0 0.0
    %678 = vmatprep.subr.mxu0 0.0
    %679 = vmatpush1.msra.mxu0 0.0
    %680 = vmatprep.subr.mxu0 0.0
    %681 = vmatpush1.msra.mxu0 0.0
    %682 = vmatprep.subr.mxu0 0.0
    %683 = vmatpush1.msra.mxu0 0.0
    %684 = vmatprep.mubr.f32.mxu0 0.0
    %685 = vmatmul.mubr.f32.gmra.mrb[0].mxu0 %v618
    %v686 = vpop.f32.mrb[0].mxu0
    %v687 = vadd.f32 %v50, %v686
    %v688 = vpop.f32.mrb[0].mxu0
    %689 = vdwg.mxu0
    %v690 = vsel %vm143, %v687, 0.0
    %691 = vadd.xlane.f32.xlu0 %v690
    %v692 = vpop.xlane.xlu0 %691
    %v693 = vrcp.pop 32.0
    %v694 = vmul.f32 %v692, %v693
    %v695 = vmul.f32 %v687, %v687
    %v696 = vsel %vm143, %v695, 0.0
    %697 = vadd.xlane.f32.xlu0 %v696
    %v698 = vpop.xlane.xlu0 %697
    %v699 = vmul.f32 %v698, %v693
    %v700 = vmul.f32 %v694, %v694
    %v701 = vsub.f32 %v699, %v700
    %v702 = vmax.f32 %v701, 0.0
    %v703 = vsub.f32 %v687, %v694
    %v704 = vadd.f32 %v702, 1e-12
    %v705 = vrsqrt.pop %v704
    %v706 = vmul.f32 %v703, %v705
    %v707 = vmul.f32 %v15, -4.0
    %v708 = vadd.f32 %v17, %v707
    %710 = vrot.lane.b32.xlu0 %v706, 32
    %v711 = vpop.permute.xlu0 %710
    %v713 = vsel %vm143, %v708, %v711
    %v715 = vsel %vm456, %v713, 0
    %717 = vmatprep.subr.mxu0 0.0
    %718 = vmatpush1.msra.mxu0 %v124
    %719 = vmatprep.subr.mxu0 0.0
    %720 = vmatpush1.msra.mxu0 %v125
    %721 = vmatprep.subr.mxu0 0.0
    %722 = vmatpush1.msra.mxu0 %v126
    %723 = vmatprep.subr.mxu0 0.0
    %724 = vmatpush1.msra.mxu0 %v127
    %725 = vmatprep.subr.mxu0 0.0
    %726 = vmatpush1.msra.mxu0 %v128
    %727 = vmatprep.subr.mxu0 0.0
    %728 = vmatpush1.msra.mxu0 %v129
    %729 = vmatprep.subr.mxu0 0.0
    %730 = vmatpush1.msra.mxu0 %v130
    %731 = vmatprep.subr.mxu0 0.0
    %732 = vmatpush1.msra.mxu0 %v131
    %733 = vmatprep.subr.mxu0 0.0
    %734 = vmatpush1.msra.mxu0 0.0
    %735 = vmatprep.subr.mxu0 0.0
    %736 = vmatpush1.msra.mxu0 0.0
    %737 = vmatprep.subr.mxu0 0.0
    %738 = vmatpush1.msra.mxu0 0.0
    %739 = vmatprep.subr.mxu0 0.0
    %740 = vmatpush1.msra.mxu0 0.0
    %741 = vmatprep.subr.mxu0 0.0
    %742 = vmatpush1.msra.mxu0 0.0
    %743 = vmatprep.subr.mxu0 0.0
    %744 = vmatpush1.msra.mxu0 0.0
    %745 = vmatprep.subr.mxu0 0.0
    %746 = vmatpush1.msra.mxu0 0.0
    %747 = vmatprep.subr.mxu0 0.0
    %748 = vmatpush1.msra.mxu0 0.0
    %749 = vmatprep.subr.mxu0 0.0
    %750 = vmatpush1.msra.mxu0 0.0
    %751 = vmatprep.subr.mxu0 0.0
    %752 = vmatpush1.msra.mxu0 0.0
    %753 = vmatprep.subr.mxu0 0.0
    %754 = vmatpush1.msra.mxu0 0.0
    %755 = vmatprep.subr.mxu0 0.0
    %756 = vmatpush1.msra.mxu0 0.0
    %757 = vmatprep.subr.mxu0 0.0
    %758 = vmatpush1.msra.mxu0 0.0
    %759 = vmatprep.subr.mxu0 0.0
    %760 = vmatpush1.msra.mxu0 0.0
    %761 = vmatprep.subr.mxu0 0.0
    %762 = vmatpush1.msra.mxu0 0.0
    %763 = vmatprep.subr.mxu0 0.0
    %764 = vmatpush1.msra.mxu0 0.0
    %765 = vmatprep.subr.mxu0 0.0
    %766 = vmatpush1.msra.mxu0 0.0
    %767 = vmatprep.subr.mxu0 0.0
    %768 = vmatpush1.msra.mxu0 0.0
    %769 = vmatprep.subr.mxu0 0.0
    %770 = vmatpush1.msra.mxu0 0.0
    %771 = vmatprep.subr.mxu0 0.0
    %772 = vmatpush1.msra.mxu0 0.0
    %773 = vmatprep.subr.mxu0 0.0
    %774 = vmatpush1.msra.mxu0 0.0
    %775 = vmatprep.subr.mxu0 0.0
    %776 = vmatpush1.msra.mxu0 0.0
    %777 = vmatprep.subr.mxu0 0.0
    %778 = vmatpush1.msra.mxu0 0.0
    %779 = vmatprep.subr.mxu0 0.0
    %780 = vmatpush1.msra.mxu0 0.0
    %781 = vmatprep.mubr.f32.mxu0 0.0
    %782 = vmatmul.mubr.f32.gmra.mrb[0].mxu0 %v715
    %v783 = vpop.f32.mrb[0].mxu0
    %v784 = vadd.f32 %v51, %v783
    %v785 = vpop.f32.mrb[0].mxu0
    %786 = vdwg.mxu0
    %787 = vst.msk [vmem:[#allocation2] sm:$0xff] %vm143, %v784
    // Predicated region
    $region14: #{tpu_custom_call.1} parent=1 // pred_check
      _
    $region15: #{tpu_custom_call.1} parent=1 // pred_check_branch
      %789 = sbr.rel (0) target = $region17
    $region16: #{tpu_custom_call.1} parent=1 // pred_region
      %s791 = ssub.s32 128, 128
      %792 = vsyncadd [#allocation3], %s791
      %s794 = sshll.u32 [#allocation2], 4
      %s795 = int_to_ptr.vmem [resolvable:$true] %s794
      %797 = dma.vmem_to_hbm [thread:$0]  %s795, 128, %s3, [#allocation3]
    $region17: #{tpu_custom_call.1} parent=1 // pred_fallthru
      _
    // Predicated region
    $region18: #{tpu_custom_call.1} parent=1 // pred_check
      _
    $region19: #{tpu_custom_call.1} parent=1 // pred_check_branch
      %799 = sbr.rel (0) target = $region21
    $region20: #{tpu_custom_call.1} parent=1 // pred_region
      %800 = dma.done [#allocation3], 128
    $region21: #{tpu_custom_call.1} parent=1 // pred_fallthru
      _
    %801 = vsyncpa [#allocation3], 1

</llo_original>
